<compile_context>
chip_gen: v6e
topology: v6e:2x2x1
jax: 0.10.0
libtpu: 0.0.40
codegen_flags: <defaults>
</compile_context>

<pallas_src>
import functools

import jax
import jax.numpy as jnp
from jax.experimental import pallas as pl
from jax.experimental.pallas import tpu as pltpu


def fused_bilinear_kernel(x_ref, w_ref, b_ref, out_ref):
    # x_ref: [TB, K_pad], w_ref: [K_pad, O_pad], b_ref: [1, O_pad], out_ref: [TB, O_pad]
    out_ref[...] = (
        jnp.dot(x_ref[...], w_ref[...], preferred_element_type=jnp.float32)
        + b_ref[...]
    ).astype(out_ref.dtype)


@functools.partial(jax.jit, static_argnames=())
def bilinear_forward(x_l, x_r, w_bi, b_bi, w_l, b_l, w_r, b_r):
    """w_bi: [O, L, R] (torch layout). w_l: [L, O], w_r: [R, O]. biases: [O]."""
    B, L = x_l.shape
    _, R = x_r.shape
    O = w_l.shape[1]

    # --- wrapper-side fusion (layout plumbing + cheap outer product) -----------
    # z_flat[b, i*R + j] = x_l[b, i] * x_r[b, j]
    z_flat = (x_l[:, :, None] * x_r[:, None, :]).reshape(B, L * R)
    x_cat = jnp.concatenate([z_flat, x_l, x_r], axis=1)            # [B, K]

    # W_flat[i*R + j, o] = w_bi[o, i, j]
    w_bi_flat = jnp.transpose(w_bi, (1, 2, 0)).reshape(L * R, O)
    w_cat = jnp.concatenate([w_bi_flat, w_l, w_r], axis=0)         # [K, O]
    bias = (b_bi + b_l + b_r).reshape(1, O)                        # [1, O]

    # --- pad to lane-dense / MXU-aligned shapes ---------------------------------
    K = L * R + L + R
    K_pad = pl.cdiv(K, 128) * 128
    O_pad = pl.cdiv(O, 128) * 128

    x_p = jnp.pad(x_cat, ((0, 0), (0, K_pad - K)))                 # [B, K_pad]
    w_p = jnp.pad(w_cat, ((0, K_pad - K), (0, O_pad - O)))         # [K_pad, O_pad]
    b_p = jnp.pad(bias, ((0, 0), (0, O_pad - O)))                  # [1, O_pad]

    # --- batch-tiled single-matmul kernel ----------------------------------------
    TB = B if B <= 256 else 256          # trivial (grid of 1) at demo sizes
    grid_b = pl.cdiv(B, TB)

    grid_spec = pltpu.PrefetchScalarGridSpec(
        num_scalar_prefetch=0,
        grid=(grid_b,),
        in_specs=[
            pl.BlockSpec((TB, K_pad), lambda b: (b, 0)),      # fused activations
            pl.BlockSpec((K_pad, O_pad), lambda b: (0, 0)),   # fused weights (resident)
            pl.BlockSpec((1, O_pad), lambda b: (0, 0)),       # fused bias
        ],
        out_specs=pl.BlockSpec((TB, O_pad), lambda b: (b, 0)),
    )

    out_padded = pl.pallas_call(
        fused_bilinear_kernel,
        out_shape=jax.ShapeDtypeStruct((B, O_pad), x_l.dtype),
        grid_spec=grid_spec,
        compiler_params=pltpu.CompilerParams(
            dimension_semantics=("parallel",)),
    )(x_p, w_p, b_p)

    return out_padded[:, :O]


def reference_forward(x_l, x_r, w_bi, b_bi, w_l, b_l, w_r, b_r):
    bil = jnp.einsum("bi,oij,bj->bo", x_l, w_bi, x_r) + b_bi
    return bil + (x_l @ w_l + b_l) + (x_r @ w_r + b_r)


if __name__ == "__main__":
    B, L, R, O = 8, 32, 16, 24   # batch, dim_left, dim_right, dim_out

    key = jax.random.PRNGKey(0)
    keys = jax.random.split(key, 8)

    # Deterministic parameter init (uniform, roughly matching torch's fan-in scaling).
    s_bi = 1.0 / jnp.sqrt(jnp.float32(L))
    s_l = 1.0 / jnp.sqrt(jnp.float32(L))
    s_r = 1.0 / jnp.sqrt(jnp.float32(R))

    w_bi = jax.random.uniform(keys[0], (O, L, R), jnp.float32, -s_bi, s_bi)
    b_bi = jax.random.uniform(keys[1], (O,), jnp.float32, -s_bi, s_bi)
    w_l = jax.random.uniform(keys[2], (L, O), jnp.float32, -s_l, s_l)   # stored [in, out]
    b_l = jax.random.uniform(keys[3], (O,), jnp.float32, -s_l, s_l)
    w_r = jax.random.uniform(keys[4], (R, O), jnp.float32, -s_r, s_r)   # stored [in, out]
    b_r = jax.random.uniform(keys[5], (O,), jnp.float32, -s_r, s_r)

    x_l = jax.random.normal(keys[6], (B, L), jnp.float32)
    x_r = jax.random.normal(keys[7], (B, R), jnp.float32)

    out = bilinear_forward(x_l, x_r, w_bi, b_bi, w_l, b_l, w_r, b_r)
    out = jax.block_until_ready(out)

    ref = reference_forward(x_l, x_r, w_bi, b_bi, w_l, b_l, w_r, b_r)
    assert out.shape == (B, O)
    assert jnp.allclose(out, ref, atol=1e-4, rtol=1e-4), (
        f"max abs err = {jnp.max(jnp.abs(out - ref))}")

    print("KERNEL_OK")
</pallas_src>

<mosaic_0001>
module attributes {stable_mosaic.version = 11 : i64} {
  func.func @fused_bilinear_kernel(%arg0: i32, %arg1: memref<8x640xf32, #tpu.memory_space<vmem>>, %arg2: memref<640x128xf32, #tpu.memory_space<vmem>>, %arg3: memref<1x128xf32, #tpu.memory_space<vmem>>, %arg4: memref<8x128xf32, #tpu.memory_space<vmem>>) attributes {dimension_semantics = [#tpu.dimension_semantics<parallel>], iteration_bounds = array<i64: 1>, scalar_prefetch = 0 : i64, scratch_operands = 0 : i64, tpu.core_type = #tpu.core_type<tc>, window_params = [{transform_indices = @transform_0, window_bounds = array<i64: 8, 640>}, {pipeline_mode = #tpu.pipeline_mode<synchronous>, transform_indices = @transform_1, window_bounds = array<i64: 640, 128>}, {pipeline_mode = #tpu.pipeline_mode<synchronous>, transform_indices = @transform_2, window_bounds = array<i64: 1, 128>}, {transform_indices = @transform_3, window_bounds = array<i64: 8, 128>}]} {
    %c0 = arith.constant 0 : index
    %c0_0 = arith.constant 0 : index
    %0 = vector.load %arg1[%c0, %c0_0] : memref<8x640xf32, #tpu.memory_space<vmem>>, vector<8x640xf32>
    %c0_1 = arith.constant 0 : index
    %c0_2 = arith.constant 0 : index
    %1 = vector.load %arg2[%c0_1, %c0_2] : memref<640x128xf32, #tpu.memory_space<vmem>>, vector<640x128xf32>
    %cst = arith.constant dense<0.000000e+00> : vector<8x128xf32>
    %2 = tpu.matmul %0, %1, %cst {dimension_numbers = #tpu.dot_dimension_numbers<[1], [0], [0], [1], [0, 0, 1, 1], [], []>} : vector<8x640xf32>, vector<640x128xf32>, vector<8x128xf32> -> vector<8x128xf32>
    %c0_3 = arith.constant 0 : index
    %c0_4 = arith.constant 0 : index
    %3 = vector.load %arg3[%c0_3, %c0_4] : memref<1x128xf32, #tpu.memory_space<vmem>>, vector<1x128xf32>
    %4 = vector.broadcast %3 : vector<1x128xf32> to vector<8x128xf32>
    %5 = arith.addf %2, %4 : vector<8x128xf32>
    %c0_5 = arith.constant 0 : index
    %c0_6 = arith.constant 0 : index
    %6 = vector.load %arg4[%c0_5, %c0_6] : memref<8x128xf32, #tpu.memory_space<vmem>>, vector<8x128xf32>
    tpu.vector_store %arg4[%c0_5, %c0_6], %5 {strides = array<i32>} : memref<8x128xf32, #tpu.memory_space<vmem>>, vector<8x128xf32>,
    return
  }
  func.func @transform_0(%arg0: i32) -> (i32, i32) {
    %c0_i32 = arith.constant 0 : i32
    %c0_i32_0 = arith.constant 0 : i32
    return %arg0, %c0_i32 : i32, i32
  }
  func.func @transform_1(%arg0: i32) -> (i32, i32) {
    %c0_i32 = arith.constant 0 : i32
    %c0_i32_0 = arith.constant 0 : i32
    %c0_i32_1 = arith.constant 0 : i32
    return %c0_i32, %c0_i32_0 : i32, i32
  }
  func.func @transform_2(%arg0: i32) -> (i32, i32) {
    %c0_i32 = arith.constant 0 : i32
    %c0_i32_0 = arith.constant 0 : i32
    %c0_i32_1 = arith.constant 0 : i32
    return %c0_i32, %c0_i32_0 : i32, i32
  }
  func.func @transform_3(%arg0: i32) -> (i32, i32) {
    %c0_i32 = arith.constant 0 : i32
    %c0_i32_0 = arith.constant 0 : i32
    return %arg0, %c0_i32 : i32, i32
  }
}

</mosaic_0001>

<llo_original>
// kernel: bilinear_forward.1
$region0: #{bilinear_forward.1}
  #allocation0 [shape = 'u32[]', space=smem, size = 0x4, offset = 0x4, fixed_abs, tag = 'smem constant byte address 0x4 - core index']
  #allocation1 [shape = 'u32[144,128]{1,0:T(1,128)}', space=vmem, size = 0x12000, scoped, tag = 'internal scratch']
  %s0 = inlined_call_operand.vmem [shape: f32[8,640], index: 0, kind: input, shape index: {}]
  %s1 = inlined_call_operand.vmem [shape: f32[640,128], index: 1, kind: input, shape index: {}]
  %s2 = inlined_call_operand.vmem [shape: f32[1,128], index: 2, kind: input, shape index: {}]
  %s3 = inlined_call_operand.hbm [shape: f32[8,128], index: 3, kind: output, shape index: {}]
  %s4 = sld [smem:[#allocation0]]
  $region22: #{bilinear_forward.1} parent=0
    _
  %s6 = ssub.s32 1, %s4
  %s7 = scalar_select 0, %s6, %s4
  $region1: #{bilinear_forward.1} parent=0
    #allocation2 [shape = 'u8[4096]{0}', space=vmem, size = 0x1000, scoped, tag = 'output window, operand 0, single buffered']
    #allocation3 [shape = 's32[1]{0}', space=sflag, size = 0x4, scoped, tag = 'scoped memory for bilinear_forward.1']
    %8 = vsyncpa [#allocation3], 0
    // Predicated region
    $region2: #{bilinear_forward.1} parent=1 // pred_check
      _
    $region3: #{bilinear_forward.1} parent=1 // pred_check_branch
      %10 = sbr.rel (0) target = $region5
    $region4: #{bilinear_forward.1} parent=1 // pred_region
      _
    $region5: #{bilinear_forward.1} parent=1 // pred_fallthru
      _
    // Predicated region
    $region6: #{bilinear_forward.1} parent=1 // pred_check
      _
    $region7: #{bilinear_forward.1} parent=1 // pred_check_branch
      %12 = sbr.rel (0) target = $region9
    $region8: #{bilinear_forward.1} parent=1 // pred_region
      _
    $region9: #{bilinear_forward.1} parent=1 // pred_fallthru
      _
    // Predicated region
    $region10: #{bilinear_forward.1} parent=1 // pred_check
      _
    $region11: #{bilinear_forward.1} parent=1 // pred_check_branch
      %14 = sbr.rel (0) target = $region13
    $region12: #{bilinear_forward.1} parent=1 // pred_region
      _
    $region13: #{bilinear_forward.1} parent=1 // pred_fallthru
      _
    %v15 = vld [vmem:[%s0] sm:$0xff]
    %v16 = vld [vmem:[%s0 + $0x8] sm:$0xff]
    %v17 = vld [vmem:[%s0 + $0x10] sm:$0xff]
    %v18 = vld [vmem:[%s0 + $0x18] sm:$0xff]
    %v19 = vld [vmem:[%s0 + $0x20] sm:$0xff]
    %v20 = vld [vmem:[%s1] sm:$0xff]
    %v21 = vld [vmem:[%s1 + $0x8] sm:$0xff]
    %v22 = vld [vmem:[%s1 + $0x10] sm:$0xff]
    %v23 = vld [vmem:[%s1 + $0x18] sm:$0xff]
    %v24 = vld [vmem:[%s1 + $0x20] sm:$0xff]
    %v25 = vld [vmem:[%s1 + $0x28] sm:$0xff]
    %v26 = vld [vmem:[%s1 + $0x30] sm:$0xff]
    %v27 = vld [vmem:[%s1 + $0x38] sm:$0xff]
    %v28 = vld [vmem:[%s1 + $0x40] sm:$0xff]
    %v29 = vld [vmem:[%s1 + $0x48] sm:$0xff]
    %v30 = vld [vmem:[%s1 + $0x50] sm:$0xff]
    %v31 = vld [vmem:[%s1 + $0x58] sm:$0xff]
    %v32 = vld [vmem:[%s1 + $0x60] sm:$0xff]
    %v33 = vld [vmem:[%s1 + $0x68] sm:$0xff]
    %v34 = vld [vmem:[%s1 + $0x70] sm:$0xff]
    %v35 = vld [vmem:[%s1 + $0x78] sm:$0xff]
    %v36 = vld [vmem:[%s1 + $0x80] sm:$0xff]
    %v37 = vld [vmem:[%s1 + $0x88] sm:$0xff]
    %v38 = vld [vmem:[%s1 + $0x90] sm:$0xff]
    %v39 = vld [vmem:[%s1 + $0x98] sm:$0xff]
    %v40 = vld [vmem:[%s1 + $0xa0] sm:$0xff]
    %v41 = vld [vmem:[%s1 + $0xa8] sm:$0xff]
    %v42 = vld [vmem:[%s1 + $0xb0] sm:$0xff]
    %v43 = vld [vmem:[%s1 + $0xb8] sm:$0xff]
    %v44 = vld [vmem:[%s1 + $0xc0] sm:$0xff]
    %v45 = vld [vmem:[%s1 + $0xc8] sm:$0xff]
    %v46 = vld [vmem:[%s1 + $0xd0] sm:$0xff]
    %v47 = vld [vmem:[%s1 + $0xd8] sm:$0xff]
    %v48 = vld [vmem:[%s1 + $0xe0] sm:$0xff]
    %v49 = vld [vmem:[%s1 + $0xe8] sm:$0xff]
    %v50 = vld [vmem:[%s1 + $0xf0] sm:$0xff]
    %v51 = vld [vmem:[%s1 + $0xf8] sm:$0xff]
    %v52 = vld [vmem:[%s1 + $0x100] sm:$0xff]
    %v53 = vld [vmem:[%s1 + $0x108] sm:$0xff]
    %v54 = vld [vmem:[%s1 + $0x110] sm:$0xff]
    %v55 = vld [vmem:[%s1 + $0x118] sm:$0xff]
    %v56 = vld [vmem:[%s1 + $0x120] sm:$0xff]
    %v57 = vld [vmem:[%s1 + $0x128] sm:$0xff]
    %v58 = vld [vmem:[%s1 + $0x130] sm:$0xff]
    %v59 = vld [vmem:[%s1 + $0x138] sm:$0xff]
    %v60 = vld [vmem:[%s1 + $0x140] sm:$0xff]
    %v61 = vld [vmem:[%s1 + $0x148] sm:$0xff]
    %v62 = vld [vmem:[%s1 + $0x150] sm:$0xff]
    %v63 = vld [vmem:[%s1 + $0x158] sm:$0xff]
    %v64 = vld [vmem:[%s1 + $0x160] sm:$0xff]
    %v65 = vld [vmem:[%s1 + $0x168] sm:$0xff]
    %v66 = vld [vmem:[%s1 + $0x170] sm:$0xff]
    %v67 = vld [vmem:[%s1 + $0x178] sm:$0xff]
    %v68 = vld [vmem:[%s1 + $0x180] sm:$0xff]
    %v69 = vld [vmem:[%s1 + $0x188] sm:$0xff]
    %v70 = vld [vmem:[%s1 + $0x190] sm:$0xff]
    %v71 = vld [vmem:[%s1 + $0x198] sm:$0xff]
    %v72 = vld [vmem:[%s1 + $0x1a0] sm:$0xff]
    %v73 = vld [vmem:[%s1 + $0x1a8] sm:$0xff]
    %v74 = vld [vmem:[%s1 + $0x1b0] sm:$0xff]
    %v75 = vld [vmem:[%s1 + $0x1b8] sm:$0xff]
    %v76 = vld [vmem:[%s1 + $0x1c0] sm:$0xff]
    %v77 = vld [vmem:[%s1 + $0x1c8] sm:$0xff]
    %v78 = vld [vmem:[%s1 + $0x1d0] sm:$0xff]
    %v79 = vld [vmem:[%s1 + $0x1d8] sm:$0xff]
    %v80 = vld [vmem:[%s1 + $0x1e0] sm:$0xff]
    %v81 = vld [vmem:[%s1 + $0x1e8] sm:$0xff]
    %v82 = vld [vmem:[%s1 + $0x1f0] sm:$0xff]
    %v83 = vld [vmem:[%s1 + $0x1f8] sm:$0xff]
    %v84 = vld [vmem:[%s1 + $0x200] sm:$0xff]
    %v85 = vld [vmem:[%s1 + $0x208] sm:$0xff]
    %v86 = vld [vmem:[%s1 + $0x210] sm:$0xff]
    %v87 = vld [vmem:[%s1 + $0x218] sm:$0xff]
    %v88 = vld [vmem:[%s1 + $0x220] sm:$0xff]
    %v89 = vld [vmem:[%s1 + $0x228] sm:$0xff]
    %v90 = vld [vmem:[%s1 + $0x230] sm:$0xff]
    %v91 = vld [vmem:[%s1 + $0x238] sm:$0xff]
    %v92 = vld [vmem:[%s1 + $0x240] sm:$0xff]
    %v93 = vld [vmem:[%s1 + $0x248] sm:$0xff]
    %v94 = vld [vmem:[%s1 + $0x250] sm:$0xff]
    %v95 = vld [vmem:[%s1 + $0x258] sm:$0xff]
    %v96 = vld [vmem:[%s1 + $0x260] sm:$0xff]
    %v97 = vld [vmem:[%s1 + $0x268] sm:$0xff]
    %v98 = vld [vmem:[%s1 + $0x270] sm:$0xff]
    %v99 = vld [vmem:[%s1 + $0x278] sm:$0xff]
    %v100 = vld [vmem:[%s2] sm:$0x1]
    %v102 = vlaneseq
    %v103 = vshrl.u32 %v102, 7
    %v104 = vsub.s32 0, %v103
    %v105 = vrot.slane %v100, %v104
    %107 = vmatprep.subr.mxu0 0.0
    %108 = vmatpush1.msra.mxu0 %v35
    %109 = vmatprep.subr.mxu0 0.0
    %110 = vmatpush1.msra.mxu0 %v34
    %111 = vmatprep.subr.mxu0 0.0
    %112 = vmatpush1.msra.mxu0 %v33
    %113 = vmatprep.subr.mxu0 0.0
    %114 = vmatpush1.msra.mxu0 %v32
    %115 = vmatprep.subr.mxu0 0.0
    %116 = vmatpush1.msra.mxu0 %v31
    %117 = vmatprep.subr.mxu0 0.0
    %118 = vmatpush1.msra.mxu0 %v30
    %119 = vmatprep.subr.mxu0 0.0
    %120 = vmatpush1.msra.mxu0 %v29
    %121 = vmatprep.subr.mxu0 0.0
    %122 = vmatpush1.msra.mxu0 %v28
    %123 = vmatprep.subr.mxu0 0.0
    %124 = vmatpush1.msra.mxu0 %v27
    %125 = vmatprep.subr.mxu0 0.0
    %126 = vmatpush1.msra.mxu0 %v26
    %127 = vmatprep.subr.mxu0 0.0
    %128 = vmatpush1.msra.mxu0 %v25
    %129 = vmatprep.subr.mxu0 0.0
    %130 = vmatpush1.msra.mxu0 %v24
    %131 = vmatprep.subr.mxu0 0.0
    %132 = vmatpush1.msra.mxu0 %v23
    %133 = vmatprep.subr.mxu0 0.0
    %134 = vmatpush1.msra.mxu0 %v22
    %135 = vmatprep.subr.mxu0 0.0
    %136 = vmatpush1.msra.mxu0 %v21
    %137 = vmatprep.subr.mxu0 0.0
    %138 = vmatpush1.msra.mxu0 %v20
    %139 = vmatprep.subr.mxu0 0.0
    %140 = vmatpush2.msra.mxu0 %v51
    %141 = vmatprep.subr.mxu0 0.0
    %142 = vmatpush2.msra.mxu0 %v50
    %143 = vmatprep.subr.mxu0 0.0
    %144 = vmatpush2.msra.mxu0 %v49
    %145 = vmatprep.subr.mxu0 0.0
    %146 = vmatpush2.msra.mxu0 %v48
    %147 = vmatprep.subr.mxu0 0.0
    %148 = vmatpush2.msra.mxu0 %v47
    %149 = vmatprep.subr.mxu0 0.0
    %150 = vmatpush2.msra.mxu0 %v46
    %151 = vmatprep.subr.mxu0 0.0
    %152 = vmatpush2.msra.mxu0 %v45
    %153 = vmatprep.subr.mxu0 0.0
    %154 = vmatpush2.msra.mxu0 %v44
    %155 = vmatprep.subr.mxu0 0.0
    %156 = vmatpush2.msra.mxu0 %v43
    %157 = vmatprep.subr.mxu0 0.0
    %158 = vmatpush2.msra.mxu0 %v42
    %159 = vmatprep.subr.mxu0 0.0
    %160 = vmatpush2.msra.mxu0 %v41
    %161 = vmatprep.subr.mxu0 0.0
    %162 = vmatpush2.msra.mxu0 %v40
    %163 = vmatprep.subr.mxu0 0.0
    %164 = vmatpush2.msra.mxu0 %v39
    %165 = vmatprep.subr.mxu0 0.0
    %166 = vmatpush2.msra.mxu0 %v38
    %167 = vmatprep.subr.mxu0 0.0
    %168 = vmatpush2.msra.mxu0 %v37
    %169 = vmatprep.subr.mxu0 0.0
    %170 = vmatpush2.msra.mxu0 %v36
    %171 = vmatprep.mubr.f32.mxu0 %v16
    %172 = vmatmul.mubr.f32.gmra.mxu0 %v15
    %v173 = vpop.f32.mrf.mxu0
    %v174 = vadd.f32 %v105, %v173
    %v175 = vpop.f32.mrf.mxu0
    %176 = vdwg.mxu0
    %177 = vmatprep.subr.mxu0 0.0
    %178 = vmatpush1.msra.mxu0 %v67
    %179 = vmatprep.subr.mxu0 0.0
    %180 = vmatpush1.msra.mxu0 %v66
    %181 = vmatprep.subr.mxu0 0.0
    %182 = vmatpush1.msra.mxu0 %v65
    %183 = vmatprep.subr.mxu0 0.0
    %184 = vmatpush1.msra.mxu0 %v64
    %185 = vmatprep.subr.mxu0 0.0
    %186 = vmatpush1.msra.mxu0 %v63
    %187 = vmatprep.subr.mxu0 0.0
    %188 = vmatpush1.msra.mxu0 %v62
    %189 = vmatprep.subr.mxu0 0.0
    %190 = vmatpush1.msra.mxu0 %v61
    %191 = vmatprep.subr.mxu0 0.0
    %192 = vmatpush1.msra.mxu0 %v60
    %193 = vmatprep.subr.mxu0 0.0
    %194 = vmatpush1.msra.mxu0 %v59
    %195 = vmatprep.subr.mxu0 0.0
    %196 = vmatpush1.msra.mxu0 %v58
    %197 = vmatprep.subr.mxu0 0.0
    %198 = vmatpush1.msra.mxu0 %v57
    %199 = vmatprep.subr.mxu0 0.0
    %200 = vmatpush1.msra.mxu0 %v56
    %201 = vmatprep.subr.mxu0 0.0
    %202 = vmatpush1.msra.mxu0 %v55
    %203 = vmatprep.subr.mxu0 0.0
    %204 = vmatpush1.msra.mxu0 %v54
    %205 = vmatprep.subr.mxu0 0.0
    %206 = vmatpush1.msra.mxu0 %v53
    %207 = vmatprep.subr.mxu0 0.0
    %208 = vmatpush1.msra.mxu0 %v52
    %209 = vmatprep.subr.mxu0 0.0
    %210 = vmatpush2.msra.mxu0 %v83
    %211 = vmatprep.subr.mxu0 0.0
    %212 = vmatpush2.msra.mxu0 %v82
    %213 = vmatprep.subr.mxu0 0.0
    %214 = vmatpush2.msra.mxu0 %v81
    %215 = vmatprep.subr.mxu0 0.0
    %216 = vmatpush2.msra.mxu0 %v80
    %217 = vmatprep.subr.mxu0 0.0
    %218 = vmatpush2.msra.mxu0 %v79
    %219 = vmatprep.subr.mxu0 0.0
    %220 = vmatpush2.msra.mxu0 %v78
    %221 = vmatprep.subr.mxu0 0.0
    %222 = vmatpush2.msra.mxu0 %v77
    %223 = vmatprep.subr.mxu0 0.0
    %224 = vmatpush2.msra.mxu0 %v76
    %225 = vmatprep.subr.mxu0 0.0
    %226 = vmatpush2.msra.mxu0 %v75
    %227 = vmatprep.subr.mxu0 0.0
    %228 = vmatpush2.msra.mxu0 %v74
    %229 = vmatprep.subr.mxu0 0.0
    %230 = vmatpush2.msra.mxu0 %v73
    %231 = vmatprep.subr.mxu0 0.0
    %232 = vmatpush2.msra.mxu0 %v72
    %233 = vmatprep.subr.mxu0 0.0
    %234 = vmatpush2.msra.mxu0 %v71
    %235 = vmatprep.subr.mxu0 0.0
    %236 = vmatpush2.msra.mxu0 %v70
    %237 = vmatprep.subr.mxu0 0.0
    %238 = vmatpush2.msra.mxu0 %v69
    %239 = vmatprep.subr.mxu0 0.0
    %240 = vmatpush2.msra.mxu0 %v68
    %241 = vmatprep.mubr.f32.mxu0 %v18
    %242 = vmatmul.mubr.f32.gmra.mxu0 %v17
    %v243 = vpop.f32.mrf.mxu0
    %v244 = vadd.f32 %v174, %v243
    %v245 = vpop.f32.mrf.mxu0
    %246 = vdwg.mxu0
    %247 = vmatprep.subr.mxu0 0.0
    %248 = vmatpush1.msra.mxu0 %v99
    %249 = vmatprep.subr.mxu0 0.0
    %250 = vmatpush1.msra.mxu0 %v98
    %251 = vmatprep.subr.mxu0 0.0
    %252 = vmatpush1.msra.mxu0 %v97
    %253 = vmatprep.subr.mxu0 0.0
    %254 = vmatpush1.msra.mxu0 %v96
    %255 = vmatprep.subr.mxu0 0.0
    %256 = vmatpush1.msra.mxu0 %v95
    %257 = vmatprep.subr.mxu0 0.0
    %258 = vmatpush1.msra.mxu0 %v94
    %259 = vmatprep.subr.mxu0 0.0
    %260 = vmatpush1.msra.mxu0 %v93
    %261 = vmatprep.subr.mxu0 0.0
    %262 = vmatpush1.msra.mxu0 %v92
    %263 = vmatprep.subr.mxu0 0.0
    %264 = vmatpush1.msra.mxu0 %v91
    %265 = vmatprep.subr.mxu0 0.0
    %266 = vmatpush1.msra.mxu0 %v90
    %267 = vmatprep.subr.mxu0 0.0
    %268 = vmatpush1.msra.mxu0 %v89
    %269 = vmatprep.subr.mxu0 0.0
    %270 = vmatpush1.msra.mxu0 %v88
    %271 = vmatprep.subr.mxu0 0.0
    %272 = vmatpush1.msra.mxu0 %v87
    %273 = vmatprep.subr.mxu0 0.0
    %274 = vmatpush1.msra.mxu0 %v86
    %275 = vmatprep.subr.mxu0 0.0
    %276 = vmatpush1.msra.mxu0 %v85
    %277 = vmatprep.subr.mxu0 0.0
    %278 = vmatpush1.msra.mxu0 %v84
    %279 = vmatprep.subr.mxu0 0.0
    %280 = vmatpush2.msra.mxu0 0.0
    %281 = vmatprep.subr.mxu0 0.0
    %282 = vmatpush2.msra.mxu0 0.0
    %283 = vmatprep.subr.mxu0 0.0
    %284 = vmatpush2.msra.mxu0 0.0
    %285 = vmatprep.subr.mxu0 0.0
    %286 = vmatpush2.msra.mxu0 0.0
    %287 = vmatprep.subr.mxu0 0.0
    %288 = vmatpush2.msra.mxu0 0.0
    %289 = vmatprep.subr.mxu0 0.0
    %290 = vmatpush2.msra.mxu0 0.0
    %291 = vmatprep.subr.mxu0 0.0
    %292 = vmatpush2.msra.mxu0 0.0
    %293 = vmatprep.subr.mxu0 0.0
    %294 = vmatpush2.msra.mxu0 0.0
    %295 = vmatprep.subr.mxu0 0.0
    %296 = vmatpush2.msra.mxu0 0.0
    %297 = vmatprep.subr.mxu0 0.0
    %298 = vmatpush2.msra.mxu0 0.0
    %299 = vmatprep.subr.mxu0 0.0
    %300 = vmatpush2.msra.mxu0 0.0
    %301 = vmatprep.subr.mxu0 0.0
    %302 = vmatpush2.msra.mxu0 0.0
    %303 = vmatprep.subr.mxu0 0.0
    %304 = vmatpush2.msra.mxu0 0.0
    %305 = vmatprep.subr.mxu0 0.0
    %306 = vmatpush2.msra.mxu0 0.0
    %307 = vmatprep.subr.mxu0 0.0
    %308 = vmatpush2.msra.mxu0 0.0
    %309 = vmatprep.subr.mxu0 0.0
    %310 = vmatpush2.msra.mxu0 0.0
    %311 = vmatprep.mubr.f32.mxu0 0.0
    %312 = vmatmul.mubr.f32.gmra.mxu0 %v19
    %v313 = vpop.f32.mrf.mxu0
    %v314 = vadd.f32 %v244, %v313
    %v315 = vpop.f32.mrf.mxu0
    %316 = vdwg.mxu0
    %317 = vst [vmem:[#allocation2] sm:$0xff] %v314
    // Predicated region
    $region14: #{bilinear_forward.1} parent=1 // pred_check
      _
    $region15: #{bilinear_forward.1} parent=1 // pred_check_branch
      %319 = sbr.rel (0) target = $region17
    $region16: #{bilinear_forward.1} parent=1 // pred_region
      %s321 = ssub.s32 128, 128
      %322 = vsyncadd [#allocation3], %s321
      %s324 = sshll.u32 [#allocation2], 4
      %s325 = int_to_ptr.vmem [resolvable:$true] %s324
      %327 = dma.vmem_to_hbm [thread:$0]  %s325, 128, %s3, [#allocation3]
    $region17: #{bilinear_forward.1} parent=1 // pred_fallthru
      _
    // Predicated region
    $region18: #{bilinear_forward.1} parent=1 // pred_check
      _
    $region19: #{bilinear_forward.1} parent=1 // pred_check_branch
      %329 = sbr.rel (0) target = $region21
    $region20: #{bilinear_forward.1} parent=1 // pred_region
      %330 = dma.done [#allocation3], 128
    $region21: #{bilinear_forward.1} parent=1 // pred_fallthru
      _
    %331 = vsyncpa [#allocation3], 1

</llo_original>
